<compile_context>
chip_gen: v5e
topology: v5e:2x2
jax: 0.10.0
libtpu: 0.0.40
codegen_flags: <defaults>
</compile_context>

<pallas_src>
import functools

import jax
import jax.numpy as jnp
from jax.experimental import pallas as pl
from jax.experimental.pallas import tpu as pltpu

WEIGHT_DTYPE = jnp.bfloat16   # bf16 weight storage (per perf review); f32 also works.


def _round_up(x, m):
    return ((x + m - 1) // m) * m


# ----------------------------------------------------------------------------
# One-time weight preparation (outside the jitted forward): fold + pad + cast.
# ----------------------------------------------------------------------------
def fold_global_model_params(sub_params, w3, b3, w4, b4, *, weight_dtype=WEIGHT_DTYPE):
    """Fold sub-model Linears into fc3 and pad everything to TPU-friendly dims."""
    H = w3.shape[1]
    C = w4.shape[1]
    hi = jax.lax.Precision.HIGHEST   # one-time prep: use full-precision matmuls

    W_blocks = []
    b_eff = b3.astype(jnp.float32)
    off = 0
    for (wi, bi) in sub_params:
        n_out = wi.shape[1]
        w3i = w3[off:off + n_out, :]
        # W_eff_i = w_i @ w3_i : (in_dim_i, H);  b_eff += b_i @ w3_i
        W_blocks.append(jnp.dot(wi.astype(jnp.float32), w3i.astype(jnp.float32),
                                precision=hi))
        b_eff = b_eff + jnp.dot(bi.astype(jnp.float32), w3i.astype(jnp.float32),
                                precision=hi)
        off += n_out
    assert off == w3.shape[0], "sub-model output dims must sum to fc3's input dim"

    W_eff = jnp.concatenate(W_blocks, axis=0)           # (K, H), K = sum in_dims
    K = W_eff.shape[0]

    # Pad to lane/sublane-aligned shapes (zero pads are exact for the matmuls;
    # padded classes get a -1e30 bias so exp() underflows to exactly 0).
    Kp = _round_up(max(K, 128), 128)
    Hp = _round_up(max(H, 128), 128)
    CP = _round_up(max(C, 128), 128)

    W_eff_p = jnp.zeros((Kp, Hp), jnp.float32).at[:K, :H].set(W_eff)
    b_eff_p = jnp.zeros((1, Hp), jnp.float32).at[:, :H].set(b_eff)
    w4_p = jnp.zeros((Hp, CP), jnp.float32).at[:H, :C].set(w4.astype(jnp.float32))
    b4_p = jnp.full((1, CP), -1e30, jnp.float32).at[:, :C].set(b4.astype(jnp.float32))

    return {
        "W_eff": W_eff_p.astype(weight_dtype),   # (Kp, Hp)  weight_dtype
        "b_eff": b_eff_p,                        # (1,  Hp)  f32
        "w4": w4_p.astype(weight_dtype),         # (Hp, CP)  weight_dtype
        "b4": b4_p,                              # (1,  CP)  f32
        "num_classes": C,
        "num_features": K,
    }


# ----------------------------------------------------------------------------
# Fused kernel: (folded fc_sub+fc3) -> ReLU -> fc4 -> log_softmax
# ----------------------------------------------------------------------------
def _fused_kernel(c_ref, w_ref, be_ref, w4_ref, b4_ref, out_ref):
    # Folded first layer: the sub-model Linears + concat + fc3 collapsed into
    # a single (TB,Kp) @ (Kp,Hp) matmul.  Weights arrive bf16; accumulate f32.
    w = w_ref[...].astype(jnp.float32)
    acc = jnp.dot(c_ref[...], w, preferred_element_type=jnp.float32) + be_ref[...]
    h = jnp.maximum(acc, 0.0)                              # ReLU

    # fc4 into a lane-dense (TB, 128) slab; padded classes carry a -1e30 bias.
    w4 = w4_ref[...].astype(jnp.float32)
    logits = jnp.dot(h, w4, preferred_element_type=jnp.float32) + b4_ref[...]

    # numerically-stable log_softmax along the class lane
    m = jnp.max(logits, axis=-1, keepdims=True)
    shifted = logits - m
    lse = jnp.log(jnp.sum(jnp.exp(shifted), axis=-1, keepdims=True))
    out_ref[...] = (shifted - lse).astype(out_ref.dtype)


# ----------------------------------------------------------------------------
# Forward (single pallas_call; batch is a 'parallel' grid axis)
# ----------------------------------------------------------------------------
@functools.partial(jax.jit, static_argnames=("num_classes",))
def _global_model_forward_impl(c, W_eff, b_eff, w4, b4, *, num_classes):
    B = c[0].shape[0]
    c_cat = jnp.concatenate([ci.astype(jnp.float32) for ci in c], axis=1)
    K = c_cat.shape[1]
    Kp, Hp = W_eff.shape
    CP = w4.shape[1]

    # Batch: pad to a sublane multiple; block in <=256-row tiles (fills the
    # MXU row dim on v6e/v7x and feeds both v7x TensorCores for large B).
    TB = min(_round_up(max(B, 8), 8), 256)
    BP = _round_up(max(B, 8), TB)
    c_pad = jnp.zeros((BP, Kp), jnp.float32).at[:B, :K].set(c_cat)

    wbytes = jnp.dtype(W_eff.dtype).itemsize
    cost = pl.CostEstimate(
        flops=2 * BP * (Kp * Hp + Hp * CP),
        transcendentals=BP * (CP + 1),
        bytes_accessed=(c_pad.size * 4 + W_eff.size * wbytes + b_eff.size * 4
                        + w4.size * wbytes + b4.size * 4 + BP * CP * 4),
    )

    out_padded = pl.pallas_call(
        _fused_kernel,
        out_shape=jax.ShapeDtypeStruct((BP, CP), jnp.float32),
        grid=(BP // TB,),
        in_specs=[
            pl.BlockSpec((TB, Kp), lambda i: (i, 0)),   # activations: per-block
            pl.BlockSpec((Kp, Hp), lambda i: (0, 0)),   # W_eff: resident
            pl.BlockSpec((1, Hp), lambda i: (0, 0)),    # b_eff: resident
            pl.BlockSpec((Hp, CP), lambda i: (0, 0)),   # w4:    resident
            pl.BlockSpec((1, CP), lambda i: (0, 0)),    # b4:    resident
        ],
        out_specs=pl.BlockSpec((TB, CP), lambda i: (i, 0)),
        compiler_params=pltpu.CompilerParams(
            dimension_semantics=("parallel",)),
        cost_estimate=cost,
    )(c_pad, W_eff, b_eff, w4, b4)

    return out_padded[:B, :num_classes]


def global_model_forward(c, folded):
    return _global_model_forward_impl(
        c, folded["W_eff"], folded["b_eff"], folded["w4"], folded["b4"],
        num_classes=folded["num_classes"])


def _uniform_init(key, shape, fan_in):
    # matches torch.nn.Linear default init: U(-1/sqrt(fan_in), 1/sqrt(fan_in))
    bound = 1.0 / jnp.sqrt(float(fan_in))
    return jax.random.uniform(key, shape, jnp.float32, -bound, bound)


if __name__ == "__main__":
    key = jax.random.PRNGKey(0)

    # Small, deterministic configuration:
    #   2 sub-models, each a Linear(32 -> 500); concat -> 1000 features.
    B = 2
    IN_DIM = 32
    NUM_MODELS = 2
    SUB_OUT = 1000 // NUM_MODELS    # 500 each
    HIDDEN = 64
    CLASSES = 10

    n_keys = 2 * NUM_MODELS + 5
    keys = jax.random.split(key, n_keys)

    # sub-model parameters (synthetic nn.Linear models)
    sub_params = []
    for i in range(NUM_MODELS):
        wi = _uniform_init(keys[2 * i], (IN_DIM, SUB_OUT), IN_DIM)
        bi = _uniform_init(keys[2 * i + 1], (1, SUB_OUT), IN_DIM)
        sub_params.append((wi, bi))

    # fc3 / fc4 parameters
    kw3, kb3, kw4, kb4, kin = keys[2 * NUM_MODELS:]
    w3 = _uniform_init(kw3, (1000, HIDDEN), 1000)
    b3 = _uniform_init(kb3, (1, HIDDEN), 1000)
    w4 = _uniform_init(kw4, (HIDDEN, CLASSES), HIDDEN)
    b4 = _uniform_init(kb4, (1, CLASSES), HIDDEN)

    # inputs: list c of per-sub-model tensors
    c = [
        jax.random.normal(jax.random.fold_in(kin, i), (B, IN_DIM), jnp.float32)
        for i in range(NUM_MODELS)
    ]

    # One-time weight prep (outside the jitted forward; reuse across calls).
    folded = fold_global_model_params(sub_params, w3, b3, w4, b4)

    out = global_model_forward(c, folded)
    out = jax.block_until_ready(out)
    assert out.shape == (B, CLASSES)

    # Reference A: original PyTorch f32 forward semantics.
    ref_outs = [ci @ wi + bi for ci, (wi, bi) in zip(c, sub_params)]
    xr = jnp.concatenate(ref_outs, axis=1)
    hr = jnp.maximum(xr @ w3 + b3, 0.0)
    lr = hr @ w4 + b4
    ref_f32 = jax.nn.log_softmax(lr, axis=1)
    # bf16 weight storage + fold reassociation -> bf16-level tolerance.
    assert jnp.allclose(out, ref_f32, atol=3e-2, rtol=3e-2), "mismatch vs f32 reference"

    # Reference B: XLA math with the *same* folded/padded weights (tight check
    # that the kernel itself is exact up to matmul rounding).
    K = folded["num_features"]
    Wf = folded["W_eff"].astype(jnp.float32)[:K, :]
    h2 = jnp.maximum(jnp.concatenate(c, axis=1) @ Wf + folded["b_eff"], 0.0)
    l2 = h2 @ folded["w4"].astype(jnp.float32) + folded["b4"]
    ref_folded = jax.nn.log_softmax(l2, axis=1)[:, :CLASSES]
    assert jnp.allclose(out, ref_folded, atol=5e-3, rtol=5e-3), "mismatch vs folded reference"

    print("KERNEL_OK")
</pallas_src>

<mosaic_0001>
module attributes {stable_mosaic.version = 11 : i64} {
  func.func @_fused_kernel(%arg0: i32, %arg1: memref<8x128xf32, #tpu.memory_space<vmem>>, %arg2: memref<128x128xbf16, #tpu.memory_space<vmem>>, %arg3: memref<1x128xf32, #tpu.memory_space<vmem>>, %arg4: memref<128x128xbf16, #tpu.memory_space<vmem>>, %arg5: memref<1x128xf32, #tpu.memory_space<vmem>>, %arg6: memref<8x128xf32, #tpu.memory_space<vmem>>) attributes {dimension_semantics = [#tpu.dimension_semantics<parallel>], iteration_bounds = array<i64: 1>, scalar_prefetch = 0 : i64, scratch_operands = 0 : i64, tpu.core_type = #tpu.core_type<tc>, window_params = [{transform_indices = @transform_0, window_bounds = array<i64: 8, 128>}, {pipeline_mode = #tpu.pipeline_mode<synchronous>, transform_indices = @transform_1, window_bounds = array<i64: 128, 128>}, {pipeline_mode = #tpu.pipeline_mode<synchronous>, transform_indices = @transform_2, window_bounds = array<i64: 1, 128>}, {pipeline_mode = #tpu.pipeline_mode<synchronous>, transform_indices = @transform_3, window_bounds = array<i64: 128, 128>}, {pipeline_mode = #tpu.pipeline_mode<synchronous>, transform_indices = @transform_4, window_bounds = array<i64: 1, 128>}, {transform_indices = @transform_5, window_bounds = array<i64: 8, 128>}]} {
    %c0 = arith.constant 0 : index
    %c0_0 = arith.constant 0 : index
    %0 = vector.load %arg2[%c0, %c0_0] : memref<128x128xbf16, #tpu.memory_space<vmem>>, vector<128x128xbf16>
    %1 = arith.extf %0 : vector<128x128xbf16> to vector<128x128xf32>
    %c0_1 = arith.constant 0 : index
    %c0_2 = arith.constant 0 : index
    %2 = vector.load %arg1[%c0_1, %c0_2] : memref<8x128xf32, #tpu.memory_space<vmem>>, vector<8x128xf32>
    %cst = arith.constant dense<0.000000e+00> : vector<8x128xf32>
    %3 = tpu.matmul %2, %1, %cst {dimension_numbers = #tpu.dot_dimension_numbers<[1], [0], [0], [1], [0, 0, 1, 1], [], []>} : vector<8x128xf32>, vector<128x128xf32>, vector<8x128xf32> -> vector<8x128xf32>
    %c0_3 = arith.constant 0 : index
    %c0_4 = arith.constant 0 : index
    %4 = vector.load %arg3[%c0_3, %c0_4] : memref<1x128xf32, #tpu.memory_space<vmem>>, vector<1x128xf32>
    %5 = vector.broadcast %4 : vector<1x128xf32> to vector<8x128xf32>
    %6 = arith.addf %3, %5 : vector<8x128xf32>
    %cst_5 = arith.constant 0.000000e+00 : f32
    %7 = vector.broadcast %cst_5 : f32 to vector<8x128xf32>
    %8 = arith.maximumf %6, %7 : vector<8x128xf32>
    %c0_6 = arith.constant 0 : index
    %c0_7 = arith.constant 0 : index
    %9 = vector.load %arg4[%c0_6, %c0_7] : memref<128x128xbf16, #tpu.memory_space<vmem>>, vector<128x128xbf16>
    %10 = arith.extf %9 : vector<128x128xbf16> to vector<128x128xf32>
    %cst_8 = arith.constant dense<0.000000e+00> : vector<8x128xf32>
    %11 = tpu.matmul %8, %10, %cst_8 {dimension_numbers = #tpu.dot_dimension_numbers<[1], [0], [0], [1], [0, 0, 1, 1], [], []>} : vector<8x128xf32>, vector<128x128xf32>, vector<8x128xf32> -> vector<8x128xf32>
    %c0_9 = arith.constant 0 : index
    %c0_10 = arith.constant 0 : index
    %12 = vector.load %arg5[%c0_9, %c0_10] : memref<1x128xf32, #tpu.memory_space<vmem>>, vector<1x128xf32>
    %13 = vector.broadcast %12 : vector<1x128xf32> to vector<8x128xf32>
    %14 = arith.addf %11, %13 : vector<8x128xf32>
    %cst_11 = arith.constant dense<0xFF800000> : vector<8xf32>
    %15 = vector.multi_reduction <maximumf>, %14, %cst_11 [1] : vector<8x128xf32> to vector<8xf32>
    %16 = vector.shape_cast %15 : vector<8xf32> to vector<8x1xf32>
    %17 = vector.broadcast %16 : vector<8x1xf32> to vector<8x128xf32>
    %18 = arith.subf %14, %17 : vector<8x128xf32>
    %19 = math.exp %18 : vector<8x128xf32>
    %cst_12 = arith.constant dense<0.000000e+00> : vector<8xf32>
    %20 = vector.multi_reduction <add>, %19, %cst_12 [1] : vector<8x128xf32> to vector<8xf32>
    %21 = vector.shape_cast %20 : vector<8xf32> to vector<8x1xf32>
    %22 = math.log %21 : vector<8x1xf32>
    %23 = vector.broadcast %22 : vector<8x1xf32> to vector<8x128xf32>
    %24 = arith.subf %18, %23 : vector<8x128xf32>
    %c0_13 = arith.constant 0 : index
    %c0_14 = arith.constant 0 : index
    %25 = vector.load %arg6[%c0_13, %c0_14] : memref<8x128xf32, #tpu.memory_space<vmem>>, vector<8x128xf32>
    tpu.vector_store %arg6[%c0_13, %c0_14], %24 {strides = array<i32>} : memref<8x128xf32, #tpu.memory_space<vmem>>, vector<8x128xf32>,
    return
  }
  func.func @transform_0(%arg0: i32) -> (i32, i32) {
    %c0_i32 = arith.constant 0 : i32
    %c0_i32_0 = arith.constant 0 : i32
    return %arg0, %c0_i32 : i32, i32
  }
  func.func @transform_1(%arg0: i32) -> (i32, i32) {
    %c0_i32 = arith.constant 0 : i32
    %c0_i32_0 = arith.constant 0 : i32
    %c0_i32_1 = arith.constant 0 : i32
    return %c0_i32, %c0_i32_0 : i32, i32
  }
  func.func @transform_2(%arg0: i32) -> (i32, i32) {
    %c0_i32 = arith.constant 0 : i32
    %c0_i32_0 = arith.constant 0 : i32
    %c0_i32_1 = arith.constant 0 : i32
    return %c0_i32, %c0_i32_0 : i32, i32
  }
  func.func @transform_3(%arg0: i32) -> (i32, i32) {
    %c0_i32 = arith.constant 0 : i32
    %c0_i32_0 = arith.constant 0 : i32
    %c0_i32_1 = arith.constant 0 : i32
    return %c0_i32, %c0_i32_0 : i32, i32
  }
  func.func @transform_4(%arg0: i32) -> (i32, i32) {
    %c0_i32 = arith.constant 0 : i32
    %c0_i32_0 = arith.constant 0 : i32
    %c0_i32_1 = arith.constant 0 : i32
    return %c0_i32, %c0_i32_0 : i32, i32
  }
  func.func @transform_5(%arg0: i32) -> (i32, i32) {
    %c0_i32 = arith.constant 0 : i32
    %c0_i32_0 = arith.constant 0 : i32
    return %arg0, %c0_i32 : i32, i32
  }
}

</mosaic_0001>

<llo_original>
// kernel: _global_model_forward_impl.1
$region0: #{_global_model_forward_impl.1}
  #allocation0 [shape = 'u32[]', space=smem, size = 0x4, offset = 0x4, fixed_abs, tag = 'smem constant byte address 0x4 - core index']
  #allocation1 [shape = 'u32[72,128]{1,0:T(1,128)}', space=vmem, size = 0x9000, scoped, tag = 'internal scratch']
  %s0 = inlined_call_operand.vmem [shape: f32[8,128], index: 0, kind: input, shape index: {}]
  %s1 = inlined_call_operand.hbm [shape: bf16[128,128], index: 1, kind: input, shape index: {}]
  %s2 = inlined_call_operand.vmem [shape: f32[1,128], index: 2, kind: input, shape index: {}]
  %s3 = inlined_call_operand.hbm [shape: bf16[128,128], index: 3, kind: input, shape index: {}]
  %s4 = inlined_call_operand.vmem [shape: f32[1,128], index: 4, kind: input, shape index: {}]
  %s5 = inlined_call_operand.vmem [shape: f32[8,128], index: 5, kind: output, shape index: {}]
  %s6 = sld [smem:[#allocation0]]
  $region38: #{_global_model_forward_impl.1} parent=0
    _
  %s8 = ssub.s32 1, %s6
  %s9 = scalar_select 0, %s8, %s6
  $region1: #{_global_model_forward_impl.1} parent=0
    #allocation2 [shape = 'u8[32768]{0}', space=vmem, size = 0x8000, scoped, tag = 'input window, operand 1, single buffered']
    #allocation3 [shape = 's32[1]{0}', space=sflag, size = 0x4, scoped, tag = 'scoped memory for _global_model_forward_impl.1']
    #allocation4 [shape = 'u8[32768]{0}', space=vmem, size = 0x8000, scoped, tag = 'input window, operand 3, single buffered']
    #allocation5 [shape = 's32[1]{0}', space=sflag, size = 0x4, scoped, tag = 'scoped memory for _global_model_forward_impl.1']
    %10 = vsyncpa [#allocation3], 0
    %11 = vsyncpa [#allocation5], 0
    // Predicated region
    $region2: #{_global_model_forward_impl.1} parent=1 // pred_check
      _
    $region3: #{_global_model_forward_impl.1} parent=1 // pred_check_branch
      %13 = sbr.rel (0) target = $region5
    $region4: #{_global_model_forward_impl.1} parent=1 // pred_region
      _
    $region5: #{_global_model_forward_impl.1} parent=1 // pred_fallthru
      _
    // Predicated region
    $region6: #{_global_model_forward_impl.1} parent=1 // pred_check
      _
    $region7: #{_global_model_forward_impl.1} parent=1 // pred_check_branch
      %15 = sbr.rel (0) target = $region9
    $region8: #{_global_model_forward_impl.1} parent=1 // pred_region
      %17 = vsyncadd [#allocation3], 0
      %s18 = sshll.u32 %s1, 4
      %s19 = int_to_ptr.hbm [resolvable:$true] %s18
      %s20 = sshll.u32 [#allocation2], 4
      %s21 = int_to_ptr.vmem [resolvable:$true] %s20
      %26 = dma.hbm_to_vmem [thread:$0]  %s19, 1024, %s21, [#allocation3], 64, 64, 4
    $region9: #{_global_model_forward_impl.1} parent=1 // pred_fallthru
      _
    // Predicated region
    $region10: #{_global_model_forward_impl.1} parent=1 // pred_check
      _
    $region11: #{_global_model_forward_impl.1} parent=1 // pred_check_branch
      %28 = sbr.rel (0) target = $region13
    $region12: #{_global_model_forward_impl.1} parent=1 // pred_region
      _
    $region13: #{_global_model_forward_impl.1} parent=1 // pred_fallthru
      _
    // Predicated region
    $region14: #{_global_model_forward_impl.1} parent=1 // pred_check
      _
    $region15: #{_global_model_forward_impl.1} parent=1 // pred_check_branch
      %30 = sbr.rel (0) target = $region17
    $region16: #{_global_model_forward_impl.1} parent=1 // pred_region
      %32 = vsyncadd [#allocation5], 0
      %s33 = sshll.u32 %s3, 4
      %s34 = int_to_ptr.hbm [resolvable:$true] %s33
      %s35 = sshll.u32 [#allocation4], 4
      %s36 = int_to_ptr.vmem [resolvable:$true] %s35
      %41 = dma.hbm_to_vmem [thread:$0]  %s34, 1024, %s36, [#allocation5], 64, 64, 4
    $region17: #{_global_model_forward_impl.1} parent=1 // pred_fallthru
      _
    // Predicated region
    $region18: #{_global_model_forward_impl.1} parent=1 // pred_check
      _
    $region19: #{_global_model_forward_impl.1} parent=1 // pred_check_branch
      %43 = sbr.rel (0) target = $region21
    $region20: #{_global_model_forward_impl.1} parent=1 // pred_region
      _
    $region21: #{_global_model_forward_impl.1} parent=1 // pred_fallthru
      _
    // Predicated region
    $region22: #{_global_model_forward_impl.1} parent=1 // pred_check
      _
    $region23: #{_global_model_forward_impl.1} parent=1 // pred_check_branch
      %45 = sbr.rel (0) target = $region25
    $region24: #{_global_model_forward_impl.1} parent=1 // pred_region
      %47 = dma.done [#allocation3], 1024
    $region25: #{_global_model_forward_impl.1} parent=1 // pred_fallthru
      _
    // Predicated region
    $region26: #{_global_model_forward_impl.1} parent=1 // pred_check
      _
    $region27: #{_global_model_forward_impl.1} parent=1 // pred_check_branch
      %49 = sbr.rel (0) target = $region29
    $region28: #{_global_model_forward_impl.1} parent=1 // pred_region
      %51 = dma.done [#allocation5], 1024
    $region29: #{_global_model_forward_impl.1} parent=1 // pred_fallthru
      _
    %v52 = vld [vmem:[#allocation2] sm:$0xf]
    %v53 = vld [vmem:[#allocation2 + $0x4] sm:$0xf]
    %v54 = vld [vmem:[#allocation2 + $0x8] sm:$0xf]
    %v55 = vld [vmem:[#allocation2 + $0xc] sm:$0xf]
    %v56 = vld [vmem:[#allocation2 + $0x10] sm:$0xf]
    %v57 = vld [vmem:[#allocation2 + $0x14] sm:$0xf]
    %v58 = vld [vmem:[#allocation2 + $0x18] sm:$0xf]
    %v59 = vld [vmem:[#allocation2 + $0x1c] sm:$0xf]
    %v60 = vld [vmem:[#allocation2 + $0x20] sm:$0xf]
    %v61 = vld [vmem:[#allocation2 + $0x24] sm:$0xf]
    %v62 = vld [vmem:[#allocation2 + $0x28] sm:$0xf]
    %v63 = vld [vmem:[#allocation2 + $0x2c] sm:$0xf]
    %v64 = vld [vmem:[#allocation2 + $0x30] sm:$0xf]
    %v65 = vld [vmem:[#allocation2 + $0x34] sm:$0xf]
    %v66 = vld [vmem:[#allocation2 + $0x38] sm:$0xf]
    %v67 = vld [vmem:[#allocation2 + $0x3c] sm:$0xf]
    %v68 = vunpack.c.l.bf16 %v52
    %v69 = vunpack.c.l.bf16 %v53
    %v70 = vunpack.c.l.bf16 %v54
    %v71 = vunpack.c.l.bf16 %v55
    %v72 = vunpack.c.l.bf16 %v56
    %v73 = vunpack.c.l.bf16 %v57
    %v74 = vunpack.c.l.bf16 %v58
    %v75 = vunpack.c.l.bf16 %v59
    %v76 = vunpack.c.l.bf16 %v60
    %v77 = vunpack.c.l.bf16 %v61
    %v78 = vunpack.c.l.bf16 %v62
    %v79 = vunpack.c.l.bf16 %v63
    %v80 = vunpack.c.l.bf16 %v64
    %v81 = vunpack.c.l.bf16 %v65
    %v82 = vunpack.c.l.bf16 %v66
    %v83 = vunpack.c.l.bf16 %v67
    %v84 = vld [vmem:[%s0] sm:$0xff]
    %v85 = vld [vmem:[%s2] sm:$0x1]
    %v87 = vperm.slane %v85, 0
    %89 = vmatpush.msra.mxu0 %v83
    %90 = vmatpush.msra.mxu0 %v82
    %91 = vmatpush.msra.mxu0 %v81
    %92 = vmatpush.msra.mxu0 %v80
    %93 = vmatpush.msra.mxu0 %v79
    %94 = vmatpush.msra.mxu0 %v78
    %95 = vmatpush.msra.mxu0 %v77
    %96 = vmatpush.msra.mxu0 %v76
    %97 = vmatpush.msra.mxu0 %v75
    %98 = vmatpush.msra.mxu0 %v74
    %99 = vmatpush.msra.mxu0 %v73
    %100 = vmatpush.msra.mxu0 %v72
    %101 = vmatpush.msra.mxu0 %v71
    %102 = vmatpush.msra.mxu0 %v70
    %103 = vmatpush.msra.mxu0 %v69
    %104 = vmatpush.msra.mxu0 %v68
    %105 = vmatmul.f32.gmra.mxu0 %v84
    %v106 = vpop.f32.mrf.mxu0
    %v107 = vadd.f32 %v87, %v106
    %108 = vdwg.mxu0
    %v109 = vmax.f32 %v107, 0.0
    %v110 = vld [vmem:[#allocation4] sm:$0xf]
    %v111 = vld [vmem:[#allocation4 + $0x4] sm:$0xf]
    %v112 = vld [vmem:[#allocation4 + $0x8] sm:$0xf]
    %v113 = vld [vmem:[#allocation4 + $0xc] sm:$0xf]
    %v114 = vld [vmem:[#allocation4 + $0x10] sm:$0xf]
    %v115 = vld [vmem:[#allocation4 + $0x14] sm:$0xf]
    %v116 = vld [vmem:[#allocation4 + $0x18] sm:$0xf]
    %v117 = vld [vmem:[#allocation4 + $0x1c] sm:$0xf]
    %v118 = vld [vmem:[#allocation4 + $0x20] sm:$0xf]
    %v119 = vld [vmem:[#allocation4 + $0x24] sm:$0xf]
    %v120 = vld [vmem:[#allocation4 + $0x28] sm:$0xf]
    %v121 = vld [vmem:[#allocation4 + $0x2c] sm:$0xf]
    %v122 = vld [vmem:[#allocation4 + $0x30] sm:$0xf]
    %v123 = vld [vmem:[#allocation4 + $0x34] sm:$0xf]
    %v124 = vld [vmem:[#allocation4 + $0x38] sm:$0xf]
    %v125 = vld [vmem:[#allocation4 + $0x3c] sm:$0xf]
    %v126 = vunpack.c.l.bf16 %v110
    %v127 = vunpack.c.l.bf16 %v111
    %v128 = vunpack.c.l.bf16 %v112
    %v129 = vunpack.c.l.bf16 %v113
    %v130 = vunpack.c.l.bf16 %v114
    %v131 = vunpack.c.l.bf16 %v115
    %v132 = vunpack.c.l.bf16 %v116
    %v133 = vunpack.c.l.bf16 %v117
    %v134 = vunpack.c.l.bf16 %v118
    %v135 = vunpack.c.l.bf16 %v119
    %v136 = vunpack.c.l.bf16 %v120
    %v137 = vunpack.c.l.bf16 %v121
    %v138 = vunpack.c.l.bf16 %v122
    %v139 = vunpack.c.l.bf16 %v123
    %v140 = vunpack.c.l.bf16 %v124
    %v141 = vunpack.c.l.bf16 %v125
    %v142 = vld [vmem:[%s4] sm:$0x1]
    %v144 = vperm.slane %v142, 0
    %146 = vmatpush.msra.mxu0 %v141
    %147 = vmatpush.msra.mxu0 %v140
    %148 = vmatpush.msra.mxu0 %v139
    %149 = vmatpush.msra.mxu0 %v138
    %150 = vmatpush.msra.mxu0 %v137
    %151 = vmatpush.msra.mxu0 %v136
    %152 = vmatpush.msra.mxu0 %v135
    %153 = vmatpush.msra.mxu0 %v134
    %154 = vmatpush.msra.mxu0 %v133
    %155 = vmatpush.msra.mxu0 %v132
    %156 = vmatpush.msra.mxu0 %v131
    %157 = vmatpush.msra.mxu0 %v130
    %158 = vmatpush.msra.mxu0 %v129
    %159 = vmatpush.msra.mxu0 %v128
    %160 = vmatpush.msra.mxu0 %v127
    %161 = vmatpush.msra.mxu0 %v126
    %162 = vmatmul.f32.gmra.mxu0 %v109
    %v163 = vpop.f32.mrf.mxu0
    %v164 = vadd.f32 %v144, %v163
    %165 = vdwg.mxu0
    %166 = vmax.xlane.f32.xlu0 %v164
    %v167 = vpop.xlane.xlu0 %166
    %v168 = vsub.f32 %v164, %v167
    %v169 = vmul.f32 %v168, 1.442695
    %v170 = vpow.pop %v169
    %171 = vadd.xlane.f32.xlu0 %v170
    %v172 = vpop.xlane.xlu0 %171
    %v173 = vlog2.pop %v172
    %v174 = vmul.f32 %v173, 0.6931472
    %v175 = vsub.f32 %v168, %v174
    %176 = vst [vmem:[%s5] sm:$0xff] %v175
    // Predicated region
    $region30: #{_global_model_forward_impl.1} parent=1 // pred_check
      _
    $region31: #{_global_model_forward_impl.1} parent=1 // pred_check_branch
      %178 = sbr.rel (0) target = $region33
    $region32: #{_global_model_forward_impl.1} parent=1 // pred_region
      _
    $region33: #{_global_model_forward_impl.1} parent=1 // pred_fallthru
      _
    // Predicated region
    $region34: #{_global_model_forward_impl.1} parent=1 // pred_check
      _
    $region35: #{_global_model_forward_impl.1} parent=1 // pred_check_branch
      %180 = sbr.rel (0) target = $region37
    $region36: #{_global_model_forward_impl.1} parent=1 // pred_region
      _
    $region37: #{_global_model_forward_impl.1} parent=1 // pred_fallthru
      _
    %181 = vsyncpa [#allocation3], 1
    %182 = vsyncpa [#allocation5], 1

</llo_original>
